<compile_context>
chip_gen: v7x
topology: tpu7x:2x2x1
jax: 0.10.0
libtpu: 0.0.40
codegen_flags: <defaults>
</compile_context>

<pallas_src>
import functools

import jax
import jax.numpy as jnp
from jax.experimental import pallas as pl
from jax.experimental.pallas import tpu as pltpu


# --------------------------------------------------------------------------- #
# Prologue: fused BN-folded projections  q,v = ftq @ [Wq|Wv] + b,  k = ftk @ Wk
# --------------------------------------------------------------------------- #
def _proj_kernel(ftq_ref, ftk_ref, wqv_ref, bqv_ref, wk_ref, bk_ref,
                 q_ref, k_ref, v_ref):
    qv = (jnp.dot(ftq_ref[...], wqv_ref[...],
                  preferred_element_type=jnp.float32) + bqv_ref[...])
    V = k_ref.shape[1]
    q_ref[...] = qv[:, :V]
    v_ref[...] = qv[:, V:]
    k_ref[...] = (jnp.dot(ftk_ref[...], wk_ref[...],
                          preferred_element_type=jnp.float32) + bk_ref[...])


# --------------------------------------------------------------------------- #
# Main kernel: tiled (dst, src) online-softmax attention aggregation
# --------------------------------------------------------------------------- #
def _atten_kernel(counts_ref, qT_ref, k_ref, v_ref, ae_ref, adjT_ref, out_ref,
                  m_sc, l_sc, acc_sc, *, num_heads):
    j = pl.program_id(0)            # dst tile
    i = pl.program_id(1)            # src tile (reduction axis)
    n_src = pl.num_programs(1)

    V = k_ref.shape[1]
    hd = V // num_heads

    @pl.when(i == 0)
    def _init():
        m_sc[...] = jnp.full_like(m_sc, -1e30)
        l_sc[...] = jnp.zeros_like(l_sc)
        acc_sc[...] = jnp.zeros_like(acc_sc)

    # ---- block-sparse skip: do nothing for (dst,src) tiles with no edges ----
    @pl.when(counts_ref[j * n_src + i] > 0)
    def _body():
        kk = k_ref[...]                               # (td, V)  dst rows
        qT = qT_ref[...]                              # (V, ts)  src columns
        vv = v_ref[...]                               # (ts, V)  src rows
        ae = ae_ref[...]                              # (1, V)
        edge = adjT_ref[...].astype(jnp.float32)      # (td, ts) mask [dst, src]
        td, ts = kk.shape[0], qT.shape[1]

        for h in range(num_heads):
            lo = h * hd
            # score[d, s] = sum_c attn_e[c] * sigmoid(k[d, c] + q[s, c]),
            # computed channel-by-channel so every intermediate is a dense
            # (td, ts) vreg tile (full 128-lane EUP/VPU utilization, no rank-3
            # temporaries).
            scores = jnp.zeros((td, ts), jnp.float32)
            for c in range(lo, lo + hd):
                e_c = kk[:, c:c + 1] + qT[c:c + 1, :]            # (td, ts)
                scores = scores + jax.nn.sigmoid(e_c) * ae[0:1, c:c + 1]

            # online softmax over the src axis, per dst row (edge_softmax)
            m_old = m_sc[:, h:h + 1]                              # (td, 1)
            m_new = jnp.maximum(m_old, jnp.max(scores, axis=1, keepdims=True))
            alpha = jnp.exp(m_old - m_new)                        # (td, 1)
            p = jnp.exp(scores - m_new) * edge                    # (td, ts)
            l_sc[:, h:h + 1] = (alpha * l_sc[:, h:h + 1]
                                + jnp.sum(p, axis=1, keepdims=True))
            acc_sc[:, lo:lo + hd] = (
                alpha * acc_sc[:, lo:lo + hd]
                + jnp.dot(p, vv[:, lo:lo + hd],
                          preferred_element_type=jnp.float32))
            m_sc[:, h:h + 1] = m_new

    @pl.when(i == n_src - 1)
    def _finalize():
        l = l_sc[...]                                  # (td, H)
        l_safe = jnp.where(l > 0.0, l, 1.0)
        r = pl.reciprocal(l_safe, approx=True)         # EUP reciprocal
        r = r * (2.0 - l_safe * r)                     # one Newton step
        inv = jnp.where(l > 0.0, r, 0.0)               # 0 in-edges -> 0 output
        for h in range(num_heads):
            lo = h * hd
            out_ref[:, lo:lo + hd] = acc_sc[:, lo:lo + hd] * inv[:, h:h + 1]


# --------------------------------------------------------------------------- #
# Wrapper
# --------------------------------------------------------------------------- #
def _fold_bn(x, w, b=None, eps=1e-5):
    """Fold training-mode BatchNorm1d (gamma=1, beta=0) into a linear layer."""
    mu = jnp.mean(x, axis=0)
    var = jnp.mean((x - mu) ** 2, axis=0)
    s = jax.lax.rsqrt(var + eps)
    w_f = s[:, None] * w
    shift = (-(mu * s) @ w)[None, :]
    b_f = shift if b is None else b + shift
    return w_f, b_f


def atten_agg_forward(ft_q, ft_k, adj, params, *, num_heads=1,
                      tile_dst=128, tile_src=128, eps=1e-5):
    N = ft_q.shape[0]
    Dq, Dk = ft_q.shape[1], ft_k.shape[1]
    V = params["wq"].shape[1]
    assert V % num_heads == 0
    assert V % 8 == 0, "val_feats must be a multiple of 8 for TPU tiling"

    # Fold BatchNorm into the projection weights (global batch statistics).
    wq_f, bq_f = _fold_bn(ft_q, params["wq"], params["bq"], eps)
    wv_f, bv_f = _fold_bn(ft_q, params["wv"], None, eps)
    wk_f, bk_f = _fold_bn(ft_k, params["wk"], None, eps)
    w_qv = jnp.concatenate([wq_f, wv_f], axis=1)          # (Dq, 2V)
    b_qv = jnp.concatenate([bq_f, bv_f], axis=1)          # (1, 2V)

    # Pad node count to the tile size; padded rows/cols carry no edges.
    def ceil_to(x, m):
        return ((x + m - 1) // m) * m
    n_pad = ceil_to(N, max(tile_dst, tile_src))
    assert n_pad % tile_dst == 0 and n_pad % tile_src == 0

    ftq_p = jnp.pad(ft_q, ((0, n_pad - N), (0, 0)))
    ftk_p = jnp.pad(ft_k, ((0, n_pad - N), (0, 0)))

    # Adjacency transposed to [dst, src]; per-tile edge flags for tile skipping.
    adjT = jnp.pad(adj, ((0, n_pad - N), (0, n_pad - N))).T
    n_dst, n_src = n_pad // tile_dst, n_pad // tile_src
    tile_has_edge = (adjT.reshape(n_dst, tile_dst, n_src, tile_src)
                     .sum(axis=(1, 3)) > 0).astype(jnp.int32).reshape(-1)
    adjT_i8 = adjT.astype(jnp.int8)

    # ---- projections (large row tiles; weights stay resident) ----
    tr = max(t for t in (512, 256, 128) if n_pad % t == 0)
    q_proj, k_proj, v_proj = pl.pallas_call(
        _proj_kernel,
        out_shape=(jax.ShapeDtypeStruct((n_pad, V), jnp.float32),
                   jax.ShapeDtypeStruct((n_pad, V), jnp.float32),
                   jax.ShapeDtypeStruct((n_pad, V), jnp.float32)),
        grid=(n_pad // tr,),
        in_specs=[
            pl.BlockSpec((tr, Dq), lambda r: (r, 0)),
            pl.BlockSpec((tr, Dk), lambda r: (r, 0)),
            pl.BlockSpec((Dq, 2 * V), lambda r: (0, 0)),
            pl.BlockSpec((1, 2 * V), lambda r: (0, 0)),
            pl.BlockSpec((Dk, V), lambda r: (0, 0)),
            pl.BlockSpec((1, V), lambda r: (0, 0)),
        ],
        out_specs=(
            pl.BlockSpec((tr, V), lambda r: (r, 0)),
            pl.BlockSpec((tr, V), lambda r: (r, 0)),
            pl.BlockSpec((tr, V), lambda r: (r, 0)),
        ),
        compiler_params=pltpu.CompilerParams(dimension_semantics=("parallel",)),
    )(ftq_p, ftk_p, w_qv, b_qv, wk_f, bk_f)

    # One-time XLA transpose so the main kernel can sublane-broadcast q rows.
    qT = q_proj.T                                           # (V, n_pad)

    # ---- tiled online-softmax attention aggregation (block-sparse skip) ----
    kernel = functools.partial(_atten_kernel, num_heads=num_heads)
    grid_spec = pltpu.PrefetchScalarGridSpec(
        num_scalar_prefetch=1,                              # tile_has_edge
        grid=(n_dst, n_src),
        in_specs=[
            pl.BlockSpec((V, tile_src), lambda j, i, c: (0, i)),        # qT
            pl.BlockSpec((tile_dst, V), lambda j, i, c: (j, 0)),        # k (dst)
            pl.BlockSpec((tile_src, V), lambda j, i, c: (i, 0)),        # v (src)
            pl.BlockSpec((1, V), lambda j, i, c: (0, 0)),               # attn_e
            pl.BlockSpec((tile_dst, tile_src), lambda j, i, c: (j, i)), # adj^T
        ],
        out_specs=pl.BlockSpec((tile_dst, V), lambda j, i, c: (j, 0)),
        scratch_shapes=[
            pltpu.VMEM((tile_dst, num_heads), jnp.float32),   # running max m
            pltpu.VMEM((tile_dst, num_heads), jnp.float32),   # running sum l
            pltpu.VMEM((tile_dst, V), jnp.float32),           # unnormalized acc
        ],
    )
    out_pad = pl.pallas_call(
        kernel,
        out_shape=jax.ShapeDtypeStruct((n_pad, V), jnp.float32),
        grid_spec=grid_spec,
        compiler_params=pltpu.CompilerParams(
            dimension_semantics=("parallel", "arbitrary"),
            vmem_limit_bytes=32 * 1024 * 1024),
    )(tile_has_edge, qT, k_proj, v_proj, params["attn_e"], adjT_i8)

    return out_pad[:N]


# --------------------------------------------------------------------------- #
# Pure-JAX reference mirroring the PyTorch/DGL forward on a dense graph
# --------------------------------------------------------------------------- #
def _batch_norm(x, eps=1e-5):
    mu = jnp.mean(x, axis=0, keepdims=True)
    var = jnp.mean((x - mu) ** 2, axis=0, keepdims=True)
    return (x - mu) / jnp.sqrt(var + eps)


def reference_forward(ft_q, ft_k, adj, params, *, num_heads=1):
    ftq, ftk = _batch_norm(ft_q), _batch_norm(ft_k)
    q = ftq @ params["wq"] + params["bq"]
    k = ftk @ params["wk"]
    v = ftq @ params["wv"]
    N, V = q.shape
    hd = V // num_heads
    e = q[:, None, :] + k[None, :, :]                      # (src, dst, V)
    s = jax.nn.sigmoid(e) * params["attn_e"]
    scores = s.reshape(N, N, num_heads, hd).sum(-1)        # (src, dst, H)
    scores = jnp.where(adj[..., None] > 0, scores, -1e30)
    p = jnp.exp(scores - scores.max(0, keepdims=True)) * adj[..., None]
    a = p / p.sum(0, keepdims=True)
    rst = jnp.einsum("ijh,ihd->jhd", a, v.reshape(N, num_heads, hd))
    return rst.reshape(N, V)


if __name__ == "__main__":
    key = jax.random.PRNGKey(0)
    N, qry_feats, key_feats, val_feats, num_heads = 200, 16, 16, 32, 2
    ks = jax.random.split(key, 8)

    ft_q = jax.random.normal(ks[0], (N, qry_feats), jnp.float32)
    ft_k = jax.random.normal(ks[1], (N, key_feats), jnp.float32)

    params = {
        "wq": 0.1 * jax.random.normal(ks[2], (qry_feats, val_feats), jnp.float32),
        "bq": 0.1 * jax.random.normal(ks[3], (1, val_feats), jnp.float32),
        "wk": 0.1 * jax.random.normal(ks[4], (key_feats, val_feats), jnp.float32),
        "wv": 0.1 * jax.random.normal(ks[5], (qry_feats, val_feats), jnp.float32),
        "attn_e": jax.random.normal(ks[6], (1, val_feats), jnp.float32),
    }

    # Random sparse graph with self-loops so every destination has >= 1 in-edge
    # (matches DGL edge_softmax being well-defined for every group).
    adj = (jax.random.uniform(ks[7], (N, N)) < 0.05).astype(jnp.float32)
    adj = jnp.maximum(adj, jnp.eye(N, dtype=jnp.float32))

    out = atten_agg_forward(ft_q, ft_k, adj, params, num_heads=num_heads)
    out = jax.block_until_ready(out)

    ref = reference_forward(ft_q, ft_k, adj, params, num_heads=num_heads)
    assert out.shape == (N, val_feats)
    err = float(jnp.max(jnp.abs(out - ref)))
    assert jnp.allclose(out, ref, atol=1e-3, rtol=1e-3), f"mismatch, max abs err={err}"

    # TODO(synk): feat_drop/attn_drop with p>0 not implemented (identity at
    # p=0.0 as in the spec); bf16 score stage (v6e/v7x-only micro-opt) not
    # applied to keep f32 accuracy on all chips (v5e has no bf16 VPU/EUP).
    print("KERNEL_OK")
</pallas_src>

<mosaic_0001>
module attributes {stable_mosaic.version = 11 : i64} {
  func.func @_proj_kernel(%arg0: i32, %arg1: memref<256x16xf32, #tpu.memory_space<vmem>>, %arg2: memref<256x16xf32, #tpu.memory_space<vmem>>, %arg3: memref<16x64xf32, #tpu.memory_space<vmem>>, %arg4: memref<1x64xf32, #tpu.memory_space<vmem>>, %arg5: memref<16x32xf32, #tpu.memory_space<vmem>>, %arg6: memref<1x32xf32, #tpu.memory_space<vmem>>, %arg7: memref<256x32xf32, #tpu.memory_space<vmem>>, %arg8: memref<256x32xf32, #tpu.memory_space<vmem>>, %arg9: memref<256x32xf32, #tpu.memory_space<vmem>>) attributes {dimension_semantics = [#tpu.dimension_semantics<parallel>], iteration_bounds = array<i64: 1>, scalar_prefetch = 0 : i64, scratch_operands = 0 : i64, tpu.core_type = #tpu.core_type<tc>, window_params = [{transform_indices = @transform_0, window_bounds = array<i64: 256, 16>}, {transform_indices = @transform_1, window_bounds = array<i64: 256, 16>}, {pipeline_mode = #tpu.pipeline_mode<synchronous>, transform_indices = @transform_2, window_bounds = array<i64: 16, 64>}, {pipeline_mode = #tpu.pipeline_mode<synchronous>, transform_indices = @transform_3, window_bounds = array<i64: 1, 64>}, {pipeline_mode = #tpu.pipeline_mode<synchronous>, transform_indices = @transform_4, window_bounds = array<i64: 16, 32>}, {pipeline_mode = #tpu.pipeline_mode<synchronous>, transform_indices = @transform_5, window_bounds = array<i64: 1, 32>}, {transform_indices = @transform_6, window_bounds = array<i64: 256, 32>}, {transform_indices = @transform_7, window_bounds = array<i64: 256, 32>}, {transform_indices = @transform_8, window_bounds = array<i64: 256, 32>}]} {
    %c0 = arith.constant 0 : index
    %c0_0 = arith.constant 0 : index
    %0 = vector.load %arg1[%c0, %c0_0] : memref<256x16xf32, #tpu.memory_space<vmem>>, vector<256x16xf32>
    %c0_1 = arith.constant 0 : index
    %c0_2 = arith.constant 0 : index
    %1 = vector.load %arg3[%c0_1, %c0_2] : memref<16x64xf32, #tpu.memory_space<vmem>>, vector<16x64xf32>
    %cst = arith.constant dense<0.000000e+00> : vector<256x64xf32>
    %2 = tpu.matmul %0, %1, %cst {dimension_numbers = #tpu.dot_dimension_numbers<[1], [0], [0], [1], [0, 0, 1, 1], [], []>} : vector<256x16xf32>, vector<16x64xf32>, vector<256x64xf32> -> vector<256x64xf32>
    %c0_3 = arith.constant 0 : index
    %c0_4 = arith.constant 0 : index
    %3 = vector.load %arg4[%c0_3, %c0_4] : memref<1x64xf32, #tpu.memory_space<vmem>>, vector<1x64xf32>
    %4 = vector.broadcast %3 : vector<1x64xf32> to vector<256x64xf32>
    %5 = arith.addf %2, %4 : vector<256x64xf32>
    %6 = vector.extract_strided_slice %5 {offsets = [0, 0], sizes = [256, 32], strides = [1, 1]} : vector<256x64xf32> to vector<256x32xf32>
    %c0_5 = arith.constant 0 : index
    %c0_6 = arith.constant 0 : index
    %7 = vector.load %arg7[%c0_5, %c0_6] : memref<256x32xf32, #tpu.memory_space<vmem>>, vector<256x32xf32>
    tpu.vector_store %arg7[%c0_5, %c0_6], %6 {strides = array<i32>} : memref<256x32xf32, #tpu.memory_space<vmem>>, vector<256x32xf32>,
    %8 = vector.extract_strided_slice %5 {offsets = [0, 32], sizes = [256, 32], strides = [1, 1]} : vector<256x64xf32> to vector<256x32xf32>
    %c0_7 = arith.constant 0 : index
    %c0_8 = arith.constant 0 : index
    %9 = vector.load %arg9[%c0_7, %c0_8] : memref<256x32xf32, #tpu.memory_space<vmem>>, vector<256x32xf32>
    tpu.vector_store %arg9[%c0_7, %c0_8], %8 {strides = array<i32>} : memref<256x32xf32, #tpu.memory_space<vmem>>, vector<256x32xf32>,
    %c0_9 = arith.constant 0 : index
    %c0_10 = arith.constant 0 : index
    %10 = vector.load %arg2[%c0_9, %c0_10] : memref<256x16xf32, #tpu.memory_space<vmem>>, vector<256x16xf32>
    %c0_11 = arith.constant 0 : index
    %c0_12 = arith.constant 0 : index
    %11 = vector.load %arg5[%c0_11, %c0_12] : memref<16x32xf32, #tpu.memory_space<vmem>>, vector<16x32xf32>
    %cst_13 = arith.constant dense<0.000000e+00> : vector<256x32xf32>
    %12 = tpu.matmul %10, %11, %cst_13 {dimension_numbers = #tpu.dot_dimension_numbers<[1], [0], [0], [1], [0, 0, 1, 1], [], []>} : vector<256x16xf32>, vector<16x32xf32>, vector<256x32xf32> -> vector<256x32xf32>
    %c0_14 = arith.constant 0 : index
    %c0_15 = arith.constant 0 : index
    %13 = vector.load %arg6[%c0_14, %c0_15] : memref<1x32xf32, #tpu.memory_space<vmem>>, vector<1x32xf32>
    %14 = vector.broadcast %13 : vector<1x32xf32> to vector<256x32xf32>
    %15 = arith.addf %12, %14 : vector<256x32xf32>
    %c0_16 = arith.constant 0 : index
    %c0_17 = arith.constant 0 : index
    %16 = vector.load %arg8[%c0_16, %c0_17] : memref<256x32xf32, #tpu.memory_space<vmem>>, vector<256x32xf32>
    tpu.vector_store %arg8[%c0_16, %c0_17], %15 {strides = array<i32>} : memref<256x32xf32, #tpu.memory_space<vmem>>, vector<256x32xf32>,
    return
  }
  func.func @transform_0(%arg0: i32) -> (i32, i32) {
    %c0_i32 = arith.constant 0 : i32
    %c0_i32_0 = arith.constant 0 : i32
    return %arg0, %c0_i32 : i32, i32
  }
  func.func @transform_1(%arg0: i32) -> (i32, i32) {
    %c0_i32 = arith.constant 0 : i32
    %c0_i32_0 = arith.constant 0 : i32
    return %arg0, %c0_i32 : i32, i32
  }
  func.func @transform_2(%arg0: i32) -> (i32, i32) {
    %c0_i32 = arith.constant 0 : i32
    %c0_i32_0 = arith.constant 0 : i32
    %c0_i32_1 = arith.constant 0 : i32
    return %c0_i32, %c0_i32_0 : i32, i32
  }
  func.func @transform_3(%arg0: i32) -> (i32, i32) {
    %c0_i32 = arith.constant 0 : i32
    %c0_i32_0 = arith.constant 0 : i32
    %c0_i32_1 = arith.constant 0 : i32
    return %c0_i32, %c0_i32_0 : i32, i32
  }
  func.func @transform_4(%arg0: i32) -> (i32, i32) {
    %c0_i32 = arith.constant 0 : i32
    %c0_i32_0 = arith.constant 0 : i32
    %c0_i32_1 = arith.constant 0 : i32
    return %c0_i32, %c0_i32_0 : i32, i32
  }
  func.func @transform_5(%arg0: i32) -> (i32, i32) {
    %c0_i32 = arith.constant 0 : i32
    %c0_i32_0 = arith.constant 0 : i32
    %c0_i32_1 = arith.constant 0 : i32
    return %c0_i32, %c0_i32_0 : i32, i32
  }
  func.func @transform_6(%arg0: i32) -> (i32, i32) {
    %c0_i32 = arith.constant 0 : i32
    %c0_i32_0 = arith.constant 0 : i32
    return %arg0, %c0_i32 : i32, i32
  }
  func.func @transform_7(%arg0: i32) -> (i32, i32) {
    %c0_i32 = arith.constant 0 : i32
    %c0_i32_0 = arith.constant 0 : i32
    return %arg0, %c0_i32 : i32, i32
  }
  func.func @transform_8(%arg0: i32) -> (i32, i32) {
    %c0_i32 = arith.constant 0 : i32
    %c0_i32_0 = arith.constant 0 : i32
    return %arg0, %c0_i32 : i32, i32
  }
}

</mosaic_0001>

<llo_original>
// kernel: tpu_custom_call.1
$region0: #{tpu_custom_call.1}
  #allocation0 [shape = 'u32[]', space=smem, size = 0x4, offset = 0x4, fixed_abs, tag = 'smem constant byte address 0x4 - core index']
  #allocation1 [shape = 'u32[144,128]{1,0:T(1,128)}', space=vmem, size = 0x12000, scoped, tag = 'internal scratch']
  %s0 = inlined_call_operand.vmem [shape: f32[256,16], index: 0, kind: input, shape index: {}]
  %s1 = inlined_call_operand.vmem [shape: f32[256,16], index: 1, kind: input, shape index: {}]
  %s2 = inlined_call_operand.vmem [shape: f32[16,64], index: 2, kind: input, shape index: {}]
  %s3 = inlined_call_operand.vmem [shape: f32[1,64], index: 3, kind: input, shape index: {}]
  %s4 = inlined_call_operand.vmem [shape: f32[16,32], index: 4, kind: input, shape index: {}]
  %s5 = inlined_call_operand.vmem [shape: f32[1,32], index: 5, kind: input, shape index: {}]
  %s6 = inlined_call_operand.vmem [shape: f32[256,32], index: 6, kind: output, shape index: {0}]
  %s7 = inlined_call_operand.vmem [shape: f32[256,32], index: 7, kind: output, shape index: {1}]
  %s8 = inlined_call_operand.vmem [shape: f32[256,32], index: 8, kind: output, shape index: {2}]
  %9 = xla_tuple %s6, %s7, %s8
  %s10 = sld [smem:[#allocation0]]
  $region50: #{tpu_custom_call.1} parent=0
    _
  %s12 = ssub.s32 1, %s10
  %s13 = scalar_select 0, %s12, %s10
  // Predicated region
  $region2: #{tpu_custom_call.1} parent=0 // pred_check
    _
  $region3: #{tpu_custom_call.1} parent=0 // pred_check_branch
    %15 = sbr.rel (0) target = $region5
  $region4: #{tpu_custom_call.1} parent=0 // pred_region
    _
  $region5: #{tpu_custom_call.1} parent=0 // pred_fallthru
    _
  // Predicated region
  $region6: #{tpu_custom_call.1} parent=0 // pred_check
    _
  $region7: #{tpu_custom_call.1} parent=0 // pred_check_branch
    %17 = sbr.rel (0) target = $region9
  $region8: #{tpu_custom_call.1} parent=0 // pred_region
    _
  $region9: #{tpu_custom_call.1} parent=0 // pred_fallthru
    _
  // Predicated region
  $region10: #{tpu_custom_call.1} parent=0 // pred_check
    _
  $region11: #{tpu_custom_call.1} parent=0 // pred_check_branch
    %19 = sbr.rel (0) target = $region13
  $region12: #{tpu_custom_call.1} parent=0 // pred_region
    _
  $region13: #{tpu_custom_call.1} parent=0 // pred_fallthru
    _
  // Predicated region
  $region14: #{tpu_custom_call.1} parent=0 // pred_check
    _
  $region15: #{tpu_custom_call.1} parent=0 // pred_check_branch
    %21 = sbr.rel (0) target = $region17
  $region16: #{tpu_custom_call.1} parent=0 // pred_region
    _
  $region17: #{tpu_custom_call.1} parent=0 // pred_fallthru
    _
  // Predicated region
  $region18: #{tpu_custom_call.1} parent=0 // pred_check
    _
  $region19: #{tpu_custom_call.1} parent=0 // pred_check_branch
    %23 = sbr.rel (0) target = $region21
  $region20: #{tpu_custom_call.1} parent=0 // pred_region
    _
  $region21: #{tpu_custom_call.1} parent=0 // pred_fallthru
    _
  // Predicated region
  $region22: #{tpu_custom_call.1} parent=0 // pred_check
    _
  $region23: #{tpu_custom_call.1} parent=0 // pred_check_branch
    %25 = sbr.rel (0) target = $region25
  $region24: #{tpu_custom_call.1} parent=0 // pred_region
    _
  $region25: #{tpu_custom_call.1} parent=0 // pred_fallthru
    _
  %v26 = vld [vmem:[%s0] sm:$0xff]
  %v27 = vld [vmem:[%s0 + $0x8] sm:$0xff]
  %v28 = vld [vmem:[%s0 + $0x10] sm:$0xff]
  %v29 = vld [vmem:[%s0 + $0x18] sm:$0xff]
  %v30 = vld [vmem:[%s0 + $0x20] sm:$0xff]
  %v31 = vld [vmem:[%s0 + $0x28] sm:$0xff]
  %v32 = vld [vmem:[%s0 + $0x30] sm:$0xff]
  %v33 = vld [vmem:[%s0 + $0x38] sm:$0xff]
  %v34 = vld [vmem:[%s0 + $0x40] sm:$0xff]
  %v35 = vld [vmem:[%s0 + $0x48] sm:$0xff]
  %v36 = vld [vmem:[%s0 + $0x50] sm:$0xff]
  %v37 = vld [vmem:[%s0 + $0x58] sm:$0xff]
  %v38 = vld [vmem:[%s0 + $0x60] sm:$0xff]
  %v39 = vld [vmem:[%s0 + $0x68] sm:$0xff]
  %v40 = vld [vmem:[%s0 + $0x70] sm:$0xff]
  %v41 = vld [vmem:[%s0 + $0x78] sm:$0xff]
  %v42 = vld [vmem:[%s0 + $0x80] sm:$0xff]
  %v43 = vld [vmem:[%s0 + $0x88] sm:$0xff]
  %v44 = vld [vmem:[%s0 + $0x90] sm:$0xff]
  %v45 = vld [vmem:[%s0 + $0x98] sm:$0xff]
  %v46 = vld [vmem:[%s0 + $0xa0] sm:$0xff]
  %v47 = vld [vmem:[%s0 + $0xa8] sm:$0xff]
  %v48 = vld [vmem:[%s0 + $0xb0] sm:$0xff]
  %v49 = vld [vmem:[%s0 + $0xb8] sm:$0xff]
  %v50 = vld [vmem:[%s0 + $0xc0] sm:$0xff]
  %v51 = vld [vmem:[%s0 + $0xc8] sm:$0xff]
  %v52 = vld [vmem:[%s0 + $0xd0] sm:$0xff]
  %v53 = vld [vmem:[%s0 + $0xd8] sm:$0xff]
  %v54 = vld [vmem:[%s0 + $0xe0] sm:$0xff]
  %v55 = vld [vmem:[%s0 + $0xe8] sm:$0xff]
  %v56 = vld [vmem:[%s0 + $0xf0] sm:$0xff]
  %v57 = vld [vmem:[%s0 + $0xf8] sm:$0xff]
  %v58 = vld [vmem:[%s2] sm:$0xff]
  %v59 = vld [vmem:[%s2 + $0x8] sm:$0xff]
  %v60 = vld [vmem:[%s3] sm:$0x1]
  %v62 = vlaneseq
  %v63 = vshrl.u32 %v62, 7
  %v64 = vsub.s32 0, %v63
  %v65 = vrot.slane %v60, %v64
  %vm67 = vcmask 130048
  %v69 = vsel %vm67, %v26, 0
  %v72 = vsel %vm67, %v27, 0
  %v75 = vsel %vm67, %v28, 0
  %v78 = vsel %vm67, %v29, 0
  %v81 = vsel %vm67, %v30, 0
  %v84 = vsel %vm67, %v31, 0
  %v87 = vsel %vm67, %v32, 0
  %v90 = vsel %vm67, %v33, 0
  %v93 = vsel %vm67, %v34, 0
  %v96 = vsel %vm67, %v35, 0
  %v99 = vsel %vm67, %v36, 0
  %v102 = vsel %vm67, %v37, 0
  %v105 = vsel %vm67, %v38, 0
  %v108 = vsel %vm67, %v39, 0
  %v111 = vsel %vm67, %v40, 0
  %v114 = vsel %vm67, %v41, 0
  %v117 = vsel %vm67, %v42, 0
  %v120 = vsel %vm67, %v43, 0
  %v123 = vsel %vm67, %v44, 0
  %v126 = vsel %vm67, %v45, 0
  %v129 = vsel %vm67, %v46, 0
  %v132 = vsel %vm67, %v47, 0
  %v135 = vsel %vm67, %v48, 0
  %v138 = vsel %vm67, %v49, 0
  %v141 = vsel %vm67, %v50, 0
  %v144 = vsel %vm67, %v51, 0
  %v147 = vsel %vm67, %v52, 0
  %v150 = vsel %vm67, %v53, 0
  %v153 = vsel %vm67, %v54, 0
  %v156 = vsel %vm67, %v55, 0
  %v159 = vsel %vm67, %v56, 0
  %v162 = vsel %vm67, %v57, 0
  %164 = vmatprep.subr.mxu0 0.0
  %165 = vmatpush1.msra.mxu0 %v58
  %166 = vmatprep.subr.mxu0 0.0
  %167 = vmatpush1.msra.mxu0 %v59
  %168 = vmatprep.subr.mxu0 0.0
  %169 = vmatpush1.msra.mxu0 0.0
  %170 = vmatprep.subr.mxu0 0.0
  %171 = vmatpush1.msra.mxu0 0.0
  %172 = vmatprep.subr.mxu0 0.0
  %173 = vmatpush1.msra.mxu0 0.0
  %174 = vmatprep.subr.mxu0 0.0
  %175 = vmatpush1.msra.mxu0 0.0
  %176 = vmatprep.subr.mxu0 0.0
  %177 = vmatpush1.msra.mxu0 0.0
  %178 = vmatprep.subr.mxu0 0.0
  %179 = vmatpush1.msra.mxu0 0.0
  %180 = vmatprep.subr.mxu0 0.0
  %181 = vmatpush1.msra.mxu0 0.0
  %182 = vmatprep.subr.mxu0 0.0
  %183 = vmatpush1.msra.mxu0 0.0
  %184 = vmatprep.subr.mxu0 0.0
  %185 = vmatpush1.msra.mxu0 0.0
  %186 = vmatprep.subr.mxu0 0.0
  %187 = vmatpush1.msra.mxu0 0.0
  %188 = vmatprep.subr.mxu0 0.0
  %189 = vmatpush1.msra.mxu0 0.0
  %190 = vmatprep.subr.mxu0 0.0
  %191 = vmatpush1.msra.mxu0 0.0
  %192 = vmatprep.subr.mxu0 0.0
  %193 = vmatpush1.msra.mxu0 0.0
  %194 = vmatprep.subr.mxu0 0.0
  %195 = vmatpush1.msra.mxu0 0.0
  %196 = vmatprep.subr.mxu0 0.0
  %197 = vmatpush1.msra.mxu0 0.0
  %198 = vmatprep.subr.mxu0 0.0
  %199 = vmatpush1.msra.mxu0 0.0
  %200 = vmatprep.subr.mxu0 0.0
  %201 = vmatpush1.msra.mxu0 0.0
  %202 = vmatprep.subr.mxu0 0.0
  %203 = vmatpush1.msra.mxu0 0.0
  %204 = vmatprep.subr.mxu0 0.0
  %205 = vmatpush1.msra.mxu0 0.0
  %206 = vmatprep.subr.mxu0 0.0
  %207 = vmatpush1.msra.mxu0 0.0
  %208 = vmatprep.subr.mxu0 0.0
  %209 = vmatpush1.msra.mxu0 0.0
  %210 = vmatprep.subr.mxu0 0.0
  %211 = vmatpush1.msra.mxu0 0.0
  %212 = vmatprep.subr.mxu0 0.0
  %213 = vmatpush1.msra.mxu0 0.0
  %214 = vmatprep.subr.mxu0 0.0
  %215 = vmatpush1.msra.mxu0 0.0
  %216 = vmatprep.subr.mxu0 0.0
  %217 = vmatpush1.msra.mxu0 0.0
  %218 = vmatprep.subr.mxu0 0.0
  %219 = vmatpush1.msra.mxu0 0.0
  %220 = vmatprep.subr.mxu0 0.0
  %221 = vmatpush1.msra.mxu0 0.0
  %222 = vmatprep.subr.mxu0 0.0
  %223 = vmatpush1.msra.mxu0 0.0
  %224 = vmatprep.subr.mxu0 0.0
  %225 = vmatpush1.msra.mxu0 0.0
  %226 = vmatprep.subr.mxu0 0.0
  %227 = vmatpush1.msra.mxu0 0.0
  %228 = vmatprep.mubr.f32.mxu0 0.0
  %229 = vmatmul.mubr.f32.gmra.mrb[0].mxu0 %v69
  %v230 = vpop.f32.mrb[0].mxu0
  %v231 = vadd.f32 %v65, %v230
  %v232 = vpop.f32.mrb[0].mxu0
  %233 = vmatprep.mubr.f32.mxu0 0.0
  %234 = vmatmul.mubr.f32.gmra.mrb[0].mxu0 %v72
  %v235 = vpop.f32.mrb[0].mxu0
  %v236 = vadd.f32 %v65, %v235
  %v237 = vpop.f32.mrb[0].mxu0
  %238 = vmatprep.mubr.f32.mxu0 0.0
  %239 = vmatmul.mubr.f32.gmra.mrb[0].mxu0 %v75
  %v240 = vpop.f32.mrb[0].mxu0
  %v241 = vadd.f32 %v65, %v240
  %v242 = vpop.f32.mrb[0].mxu0
  %243 = vmatprep.mubr.f32.mxu0 0.0
  %244 = vmatmul.mubr.f32.gmra.mrb[0].mxu0 %v78
  %v245 = vpop.f32.mrb[0].mxu0
  %v246 = vadd.f32 %v65, %v245
  %v247 = vpop.f32.mrb[0].mxu0
  %248 = vmatprep.mubr.f32.mxu0 0.0
  %249 = vmatmul.mubr.f32.gmra.mrb[0].mxu0 %v81
  %v250 = vpop.f32.mrb[0].mxu0
  %v251 = vadd.f32 %v65, %v250
  %v252 = vpop.f32.mrb[0].mxu0
  %253 = vmatprep.mubr.f32.mxu0 0.0
  %254 = vmatmul.mubr.f32.gmra.mrb[0].mxu0 %v84
  %v255 = vpop.f32.mrb[0].mxu0
  %v256 = vadd.f32 %v65, %v255
  %v257 = vpop.f32.mrb[0].mxu0
  %258 = vmatprep.mubr.f32.mxu0 0.0
  %259 = vmatmul.mubr.f32.gmra.mrb[0].mxu0 %v87
  %v260 = vpop.f32.mrb[0].mxu0
  %v261 = vadd.f32 %v65, %v260
  %v262 = vpop.f32.mrb[0].mxu0
  %263 = vmatprep.mubr.f32.mxu0 0.0
  %264 = vmatmul.mubr.f32.gmra.mrb[0].mxu0 %v90
  %v265 = vpop.f32.mrb[0].mxu0
  %v266 = vadd.f32 %v65, %v265
  %v267 = vpop.f32.mrb[0].mxu0
  %268 = vmatprep.mubr.f32.mxu0 0.0
  %269 = vmatmul.mubr.f32.gmra.mrb[0].mxu0 %v93
  %v270 = vpop.f32.mrb[0].mxu0
  %v271 = vadd.f32 %v65, %v270
  %v272 = vpop.f32.mrb[0].mxu0
  %273 = vmatprep.mubr.f32.mxu0 0.0
  %274 = vmatmul.mubr.f32.gmra.mrb[0].mxu0 %v96
  %v275 = vpop.f32.mrb[0].mxu0
  %v276 = vadd.f32 %v65, %v275
  %v277 = vpop.f32.mrb[0].mxu0
  %278 = vmatprep.mubr.f32.mxu0 0.0
  %279 = vmatmul.mubr.f32.gmra.mrb[0].mxu0 %v99
  %v280 = vpop.f32.mrb[0].mxu0
  %v281 = vadd.f32 %v65, %v280
  %v282 = vpop.f32.mrb[0].mxu0
  %283 = vmatprep.mubr.f32.mxu0 0.0
  %284 = vmatmul.mubr.f32.gmra.mrb[0].mxu0 %v102
  %v285 = vpop.f32.mrb[0].mxu0
  %v286 = vadd.f32 %v65, %v285
  %v287 = vpop.f32.mrb[0].mxu0
  %288 = vmatprep.mubr.f32.mxu0 0.0
  %289 = vmatmul.mubr.f32.gmra.mrb[0].mxu0 %v105
  %v290 = vpop.f32.mrb[0].mxu0
  %v291 = vadd.f32 %v65, %v290
  %v292 = vpop.f32.mrb[0].mxu0
  %293 = vmatprep.mubr.f32.mxu0 0.0
  %294 = vmatmul.mubr.f32.gmra.mrb[0].mxu0 %v108
  %v295 = vpop.f32.mrb[0].mxu0
  %v296 = vadd.f32 %v65, %v295
  %v297 = vpop.f32.mrb[0].mxu0
  %298 = vmatprep.mubr.f32.mxu0 0.0
  %299 = vmatmul.mubr.f32.gmra.mrb[0].mxu0 %v111
  %v300 = vpop.f32.mrb[0].mxu0
  %v301 = vadd.f32 %v65, %v300
  %v302 = vpop.f32.mrb[0].mxu0
  %303 = vmatprep.mubr.f32.mxu0 0.0
  %304 = vmatmul.mubr.f32.gmra.mrb[0].mxu0 %v114
  %v305 = vpop.f32.mrb[0].mxu0
  %v306 = vadd.f32 %v65, %v305
  %v307 = vpop.f32.mrb[0].mxu0
  %308 = vmatprep.mubr.f32.mxu0 0.0
  %309 = vmatmul.mubr.f32.gmra.mrb[0].mxu0 %v117
  %v310 = vpop.f32.mrb[0].mxu0
  %v311 = vadd.f32 %v65, %v310
  %v312 = vpop.f32.mrb[0].mxu0
  %313 = vmatprep.mubr.f32.mxu0 0.0
  %314 = vmatmul.mubr.f32.gmra.mrb[0].mxu0 %v120
  %v315 = vpop.f32.mrb[0].mxu0
  %v316 = vadd.f32 %v65, %v315
  %v317 = vpop.f32.mrb[0].mxu0
  %318 = vmatprep.mubr.f32.mxu0 0.0
  %319 = vmatmul.mubr.f32.gmra.mrb[0].mxu0 %v123
  %v320 = vpop.f32.mrb[0].mxu0
  %v321 = vadd.f32 %v65, %v320
  %v322 = vpop.f32.mrb[0].mxu0
  %323 = vmatprep.mubr.f32.mxu0 0.0
  %324 = vmatmul.mubr.f32.gmra.mrb[0].mxu0 %v126
  %v325 = vpop.f32.mrb[0].mxu0
  %v326 = vadd.f32 %v65, %v325
  %v327 = vpop.f32.mrb[0].mxu0
  %328 = vmatprep.mubr.f32.mxu0 0.0
  %329 = vmatmul.mubr.f32.gmra.mrb[0].mxu0 %v129
  %v330 = vpop.f32.mrb[0].mxu0
  %v331 = vadd.f32 %v65, %v330
  %v332 = vpop.f32.mrb[0].mxu0
  %333 = vmatprep.mubr.f32.mxu0 0.0
  %334 = vmatmul.mubr.f32.gmra.mrb[0].mxu0 %v132
  %v335 = vpop.f32.mrb[0].mxu0
  %v336 = vadd.f32 %v65, %v335
  %v337 = vpop.f32.mrb[0].mxu0
  %338 = vmatprep.mubr.f32.mxu0 0.0
  %339 = vmatmul.mubr.f32.gmra.mrb[0].mxu0 %v135
  %v340 = vpop.f32.mrb[0].mxu0
  %v341 = vadd.f32 %v65, %v340
  %v342 = vpop.f32.mrb[0].mxu0
  %343 = vmatprep.mubr.f32.mxu0 0.0
  %344 = vmatmul.mubr.f32.gmra.mrb[0].mxu0 %v138
  %v345 = vpop.f32.mrb[0].mxu0
  %v346 = vadd.f32 %v65, %v345
  %v347 = vpop.f32.mrb[0].mxu0
  %348 = vmatprep.mubr.f32.mxu0 0.0
  %349 = vmatmul.mubr.f32.gmra.mrb[0].mxu0 %v141
  %v350 = vpop.f32.mrb[0].mxu0
  %v351 = vadd.f32 %v65, %v350
  %v352 = vpop.f32.mrb[0].mxu0
  %353 = vmatprep.mubr.f32.mxu0 0.0
  %354 = vmatmul.mubr.f32.gmra.mrb[0].mxu0 %v144
  %v355 = vpop.f32.mrb[0].mxu0
  %v356 = vadd.f32 %v65, %v355
  %v357 = vpop.f32.mrb[0].mxu0
  %358 = vmatprep.mubr.f32.mxu0 0.0
  %359 = vmatmul.mubr.f32.gmra.mrb[0].mxu0 %v147
  %v360 = vpop.f32.mrb[0].mxu0
  %v361 = vadd.f32 %v65, %v360
  %v362 = vpop.f32.mrb[0].mxu0
  %363 = vmatprep.mubr.f32.mxu0 0.0
  %364 = vmatmul.mubr.f32.gmra.mrb[0].mxu0 %v150
  %v365 = vpop.f32.mrb[0].mxu0
  %v366 = vadd.f32 %v65, %v365
  %v367 = vpop.f32.mrb[0].mxu0
  %368 = vmatprep.mubr.f32.mxu0 0.0
  %369 = vmatmul.mubr.f32.gmra.mrb[0].mxu0 %v153
  %v370 = vpop.f32.mrb[0].mxu0
  %v371 = vadd.f32 %v65, %v370
  %v372 = vpop.f32.mrb[0].mxu0
  %373 = vmatprep.mubr.f32.mxu0 0.0
  %374 = vmatmul.mubr.f32.gmra.mrb[0].mxu0 %v156
  %v375 = vpop.f32.mrb[0].mxu0
  %v376 = vadd.f32 %v65, %v375
  %v377 = vpop.f32.mrb[0].mxu0
  %378 = vmatprep.mubr.f32.mxu0 0.0
  %379 = vmatmul.mubr.f32.gmra.mrb[0].mxu0 %v159
  %v380 = vpop.f32.mrb[0].mxu0
  %v381 = vadd.f32 %v65, %v380
  %v382 = vpop.f32.mrb[0].mxu0
  %383 = vmatprep.mubr.f32.mxu0 0.0
  %384 = vmatmul.mubr.f32.gmra.mrb[0].mxu0 %v162
  %v385 = vpop.f32.mrb[0].mxu0
  %v386 = vadd.f32 %v65, %v385
  %v387 = vpop.f32.mrb[0].mxu0
  %388 = vdwg.mxu0
  %vm389 = vcmask 261120
  %390 = vst.msk [vmem:[%s6] sm:$0xff] %vm389, %v231
  %391 = vst.msk [vmem:[%s6 + $0x8] sm:$0xff] %vm389, %v236
  %392 = vst.msk [vmem:[%s6 + $0x10] sm:$0xff] %vm389, %v241
  %393 = vst.msk [vmem:[%s6 + $0x18] sm:$0xff] %vm389, %v246
  %394 = vst.msk [vmem:[%s6 + $0x20] sm:$0xff] %vm389, %v251
  %395 = vst.msk [vmem:[%s6 + $0x28] sm:$0xff] %vm389, %v256
  %396 = vst.msk [vmem:[%s6 + $0x30] sm:$0xff] %vm389, %v261
  %397 = vst.msk [vmem:[%s6 + $0x38] sm:$0xff] %vm389, %v266
  %398 = vst.msk [vmem:[%s6 + $0x40] sm:$0xff] %vm389, %v271
  %399 = vst.msk [vmem:[%s6 + $0x48] sm:$0xff] %vm389, %v276
  %400 = vst.msk [vmem:[%s6 + $0x50] sm:$0xff] %vm389, %v281
  %401 = vst.msk [vmem:[%s6 + $0x58] sm:$0xff] %vm389, %v286
  %402 = vst.msk [vmem:[%s6 + $0x60] sm:$0xff] %vm389, %v291
  %403 = vst.msk [vmem:[%s6 + $0x68] sm:$0xff] %vm389, %v296
  %404 = vst.msk [vmem:[%s6 + $0x70] sm:$0xff] %vm389, %v301
  %405 = vst.msk [vmem:[%s6 + $0x78] sm:$0xff] %vm389, %v306
  %406 = vst.msk [vmem:[%s6 + $0x80] sm:$0xff] %vm389, %v311
  %407 = vst.msk [vmem:[%s6 + $0x88] sm:$0xff] %vm389, %v316
  %408 = vst.msk [vmem:[%s6 + $0x90] sm:$0xff] %vm389, %v321
  %409 = vst.msk [vmem:[%s6 + $0x98] sm:$0xff] %vm389, %v326
  %410 = vst.msk [vmem:[%s6 + $0xa0] sm:$0xff] %vm389, %v331
  %411 = vst.msk [vmem:[%s6 + $0xa8] sm:$0xff] %vm389, %v336
  %412 = vst.msk [vmem:[%s6 + $0xb0] sm:$0xff] %vm389, %v341
  %413 = vst.msk [vmem:[%s6 + $0xb8] sm:$0xff] %vm389, %v346
  %414 = vst.msk [vmem:[%s6 + $0xc0] sm:$0xff] %vm389, %v351
  %415 = vst.msk [vmem:[%s6 + $0xc8] sm:$0xff] %vm389, %v356
  %416 = vst.msk [vmem:[%s6 + $0xd0] sm:$0xff] %vm389, %v361
  %417 = vst.msk [vmem:[%s6 + $0xd8] sm:$0xff] %vm389, %v366
  %418 = vst.msk [vmem:[%s6 + $0xe0] sm:$0xff] %vm389, %v371
  %419 = vst.msk [vmem:[%s6 + $0xe8] sm:$0xff] %vm389, %v376
  %420 = vst.msk [vmem:[%s6 + $0xf0] sm:$0xff] %vm389, %v381
  %421 = vst.msk [vmem:[%s6 + $0xf8] sm:$0xff] %vm389, %v386
  %454 = vrot.lane.b32.xlu0 %v231, 96
  %v455 = vpop.permute.xlu0 %454
  %456 = vrot.lane.b32.xlu0 %v236, 96
  %v457 = vpop.permute.xlu0 %456
  %458 = vrot.lane.b32.xlu0 %v241, 96
  %v459 = vpop.permute.xlu0 %458
  %460 = vrot.lane.b32.xlu0 %v246, 96
  %v461 = vpop.permute.xlu0 %460
  %462 = vrot.lane.b32.xlu0 %v251, 96
  %v463 = vpop.permute.xlu0 %462
  %464 = vrot.lane.b32.xlu0 %v256, 96
  %v465 = vpop.permute.xlu0 %464
  %466 = vrot.lane.b32.xlu0 %v261, 96
  %v467 = vpop.permute.xlu0 %466
  %468 = vrot.lane.b32.xlu0 %v266, 96
  %v469 = vpop.permute.xlu0 %468
  %470 = vrot.lane.b32.xlu0 %v271, 96
  %v471 = vpop.permute.xlu0 %470
  %472 = vrot.lane.b32.xlu0 %v276, 96
  %v473 = vpop.permute.xlu0 %472
  %474 = vrot.lane.b32.xlu0 %v281, 96
  %v475 = vpop.permute.xlu0 %474
  %476 = vrot.lane.b32.xlu0 %v286, 96
  %v477 = vpop.permute.xlu0 %476
  %478 = vrot.lane.b32.xlu0 %v291, 96
  %v479 = vpop.permute.xlu0 %478
  %480 = vrot.lane.b32.xlu0 %v296, 96
  %v481 = vpop.permute.xlu0 %480
  %482 = vrot.lane.b32.xlu0 %v301, 96
  %v483 = vpop.permute.xlu0 %482
  %484 = vrot.lane.b32.xlu0 %v306, 96
  %v485 = vpop.permute.xlu0 %484
  %486 = vrot.lane.b32.xlu0 %v311, 96
  %v487 = vpop.permute.xlu0 %486
  %488 = vrot.lane.b32.xlu0 %v316, 96
  %v489 = vpop.permute.xlu0 %488
  %490 = vrot.lane.b32.xlu0 %v321, 96
  %v491 = vpop.permute.xlu0 %490
  %492 = vrot.lane.b32.xlu0 %v326, 96
  %v493 = vpop.permute.xlu0 %492
  %494 = vrot.lane.b32.xlu0 %v331, 96
  %v495 = vpop.permute.xlu0 %494
  %496 = vrot.lane.b32.xlu0 %v336, 96
  %v497 = vpop.permute.xlu0 %496
  %498 = vrot.lane.b32.xlu0 %v341, 96
  %v499 = vpop.permute.xlu0 %498
  %500 = vrot.lane.b32.xlu0 %v346, 96
  %v501 = vpop.permute.xlu0 %500
  %502 = vrot.lane.b32.xlu0 %v351, 96
  %v503 = vpop.permute.xlu0 %502
  %504 = vrot.lane.b32.xlu0 %v356, 96
  %v505 = vpop.permute.xlu0 %504
  %506 = vrot.lane.b32.xlu0 %v361, 96
  %v507 = vpop.permute.xlu0 %506
  %508 = vrot.lane.b32.xlu0 %v366, 96
  %v509 = vpop.permute.xlu0 %508
  %510 = vrot.lane.b32.xlu0 %v371, 96
  %v511 = vpop.permute.xlu0 %510
  %512 = vrot.lane.b32.xlu0 %v376, 96
  %v513 = vpop.permute.xlu0 %512
  %514 = vrot.lane.b32.xlu0 %v381, 96
  %v515 = vpop.permute.xlu0 %514
  %516 = vrot.lane.b32.xlu0 %v386, 96
  %v517 = vpop.permute.xlu0 %516
  %550 = vst.msk [vmem:[%s8] sm:$0xff] %vm389, %v455
  %551 = vst.msk [vmem:[%s8 + $0x8] sm:$0xff] %vm389, %v457
  %552 = vst.msk [vmem:[%s8 + $0x10] sm:$0xff] %vm389, %v459
  %553 = vst.msk [vmem:[%s8 + $0x18] sm:$0xff] %vm389, %v461
  %554 = vst.msk [vmem:[%s8 + $0x20] sm:$0xff] %vm389, %v463
  %555 = vst.msk [vmem:[%s8 + $0x28] sm:$0xff] %vm389, %v465
  %556 = vst.msk [vmem:[%s8 + $0x30] sm:$0xff] %vm389, %v467
  %557 = vst.msk [vmem:[%s8 + $0x38] sm:$0xff] %vm389, %v469
  %558 = vst.msk [vmem:[%s8 + $0x40] sm:$0xff] %vm389, %v471
  %559 = vst.msk [vmem:[%s8 + $0x48] sm:$0xff] %vm389, %v473
  %560 = vst.msk [vmem:[%s8 + $0x50] sm:$0xff] %vm389, %v475
  %561 = vst.msk [vmem:[%s8 + $0x58] sm:$0xff] %vm389, %v477
  %562 = vst.msk [vmem:[%s8 + $0x60] sm:$0xff] %vm389, %v479
  %563 = vst.msk [vmem:[%s8 + $0x68] sm:$0xff] %vm389, %v481
  %564 = vst.msk [vmem:[%s8 + $0x70] sm:$0xff] %vm389, %v483
  %565 = vst.msk [vmem:[%s8 + $0x78] sm:$0xff] %vm389, %v485
  %566 = vst.msk [vmem:[%s8 + $0x80] sm:$0xff] %vm389, %v487
  %567 = vst.msk [vmem:[%s8 + $0x88] sm:$0xff] %vm389, %v489
  %568 = vst.msk [vmem:[%s8 + $0x90] sm:$0xff] %vm389, %v491
  %569 = vst.msk [vmem:[%s8 + $0x98] sm:$0xff] %vm389, %v493
  %570 = vst.msk [vmem:[%s8 + $0xa0] sm:$0xff] %vm389, %v495
  %571 = vst.msk [vmem:[%s8 + $0xa8] sm:$0xff] %vm389, %v497
  %572 = vst.msk [vmem:[%s8 + $0xb0] sm:$0xff] %vm389, %v499
  %573 = vst.msk [vmem:[%s8 + $0xb8] sm:$0xff] %vm389, %v501
  %574 = vst.msk [vmem:[%s8 + $0xc0] sm:$0xff] %vm389, %v503
  %575 = vst.msk [vmem:[%s8 + $0xc8] sm:$0xff] %vm389, %v505
  %576 = vst.msk [vmem:[%s8 + $0xd0] sm:$0xff] %vm389, %v507
  %577 = vst.msk [vmem:[%s8 + $0xd8] sm:$0xff] %vm389, %v509
  %578 = vst.msk [vmem:[%s8 + $0xe0] sm:$0xff] %vm389, %v511
  %579 = vst.msk [vmem:[%s8 + $0xe8] sm:$0xff] %vm389, %v513
  %580 = vst.msk [vmem:[%s8 + $0xf0] sm:$0xff] %vm389, %v515
  %581 = vst.msk [vmem:[%s8 + $0xf8] sm:$0xff] %vm389, %v517
  %v582 = vld [vmem:[%s1] sm:$0xff]
  %v583 = vld [vmem:[%s1 + $0x8] sm:$0xff]
  %v584 = vld [vmem:[%s1 + $0x10] sm:$0xff]
  %v585 = vld [vmem:[%s1 + $0x18] sm:$0xff]
  %v586 = vld [vmem:[%s1 + $0x20] sm:$0xff]
  %v587 = vld [vmem:[%s1 + $0x28] sm:$0xff]
  %v588 = vld [vmem:[%s1 + $0x30] sm:$0xff]
  %v589 = vld [vmem:[%s1 + $0x38] sm:$0xff]
  %v590 = vld [vmem:[%s1 + $0x40] sm:$0xff]
  %v591 = vld [vmem:[%s1 + $0x48] sm:$0xff]
  %v592 = vld [vmem:[%s1 + $0x50] sm:$0xff]
  %v593 = vld [vmem:[%s1 + $0x58] sm:$0xff]
  %v594 = vld [vmem:[%s1 + $0x60] sm:$0xff]
  %v595 = vld [vmem:[%s1 + $0x68] sm:$0xff]
  %v596 = vld [vmem:[%s1 + $0x70] sm:$0xff]
  %v597 = vld [vmem:[%s1 + $0x78] sm:$0xff]
  %v598 = vld [vmem:[%s1 + $0x80] sm:$0xff]
  %v599 = vld [vmem:[%s1 + $0x88] sm:$0xff]
  %v600 = vld [vmem:[%s1 + $0x90] sm:$0xff]
  %v601 = vld [vmem:[%s1 + $0x98] sm:$0xff]
  %v602 = vld [vmem:[%s1 + $0xa0] sm:$0xff]
  %v603 = vld [vmem:[%s1 + $0xa8] sm:$0xff]
  %v604 = vld [vmem:[%s1 + $0xb0] sm:$0xff]
  %v605 = vld [vmem:[%s1 + $0xb8] sm:$0xff]
  %v606 = vld [vmem:[%s1 + $0xc0] sm:$0xff]
  %v607 = vld [vmem:[%s1 + $0xc8] sm:$0xff]
  %v608 = vld [vmem:[%s1 + $0xd0] sm:$0xff]
  %v609 = vld [vmem:[%s1 + $0xd8] sm:$0xff]
  %v610 = vld [vmem:[%s1 + $0xe0] sm:$0xff]
  %v611 = vld [vmem:[%s1 + $0xe8] sm:$0xff]
  %v612 = vld [vmem:[%s1 + $0xf0] sm:$0xff]
  %v613 = vld [vmem:[%s1 + $0xf8] sm:$0xff]
  %v614 = vld [vmem:[%s4] sm:$0xff]
  %v615 = vld [vmem:[%s4 + $0x8] sm:$0xff]
  %v616 = vld [vmem:[%s5] sm:$0x1]
  %v618 = vlaneseq
  %v619 = vshrl.u32 %v618, 7
  %v620 = vsub.s32 0, %v619
  %v621 = vrot.slane %v616, %v620
  %v624 = vsel %vm67, %v582, 0
  %v627 = vsel %vm67, %v583, 0
  %v630 = vsel %vm67, %v584, 0
  %v633 = vsel %vm67, %v585, 0
  %v636 = vsel %vm67, %v586, 0
  %v639 = vsel %vm67, %v587, 0
  %v642 = vsel %vm67, %v588, 0
  %v645 = vsel %vm67, %v589, 0
  %v648 = vsel %vm67, %v590, 0
  %v651 = vsel %vm67, %v591, 0
  %v654 = vsel %vm67, %v592, 0
  %v657 = vsel %vm67, %v593, 0
  %v660 = vsel %vm67, %v594, 0
  %v663 = vsel %vm67, %v595, 0
  %v666 = vsel %vm67, %v596, 0
  %v669 = vsel %vm67, %v597, 0
  %v672 = vsel %vm67, %v598, 0
  %v675 = vsel %vm67, %v599, 0
  %v678 = vsel %vm67, %v600, 0
  %v681 = vsel %vm67, %v601, 0
  %v684 = vsel %vm67, %v602, 0
  %v687 = vsel %vm67, %v603, 0
  %v690 = vsel %vm67, %v604, 0
  %v693 = vsel %vm67, %v605, 0
  %v696 = vsel %vm67, %v606, 0
  %v699 = vsel %vm67, %v607, 0
  %v702 = vsel %vm67, %v608, 0
  %v705 = vsel %vm67, %v609, 0
  %v708 = vsel %vm67, %v610, 0
  %v711 = vsel %vm67, %v611, 0
  %v714 = vsel %vm67, %v612, 0
  %v717 = vsel %vm67, %v613, 0
  %719 = vmatprep.subr.mxu0 0.0
  %720 = vmatpush1.msra.mxu0 %v614
  %721 = vmatprep.subr.mxu0 0.0
  %722 = vmatpush1.msra.mxu0 %v615
  %723 = vmatprep.subr.mxu0 0.0
  %724 = vmatpush1.msra.mxu0 0.0
  %725 = vmatprep.subr.mxu0 0.0
  %726 = vmatpush1.msra.mxu0 0.0
  %727 = vmatprep.subr.mxu0 0.0
  %728 = vmatpush1.msra.mxu0 0.0
  %729 = vmatprep.subr.mxu0 0.0
  %730 = vmatpush1.msra.mxu0 0.0
  %731 = vmatprep.subr.mxu0 0.0
  %732 = vmatpush1.msra.mxu0 0.0
  %733 = vmatprep.subr.mxu0 0.0
  %734 = vmatpush1.msra.mxu0 0.0
  %735 = vmatprep.subr.mxu0 0.0
  %736 = vmatpush1.msra.mxu0 0.0
  %737 = vmatprep.subr.mxu0 0.0
  %738 = vmatpush1.msra.mxu0 0.0
  %739 = vmatprep.subr.mxu0 0.0
  %740 = vmatpush1.msra.mxu0 0.0
  %741 = vmatprep.subr.mxu0 0.0
  %742 = vmatpush1.msra.mxu0 0.0
  %743 = vmatprep.subr.mxu0 0.0
  %744 = vmatpush1.msra.mxu0 0.0
  %745 = vmatprep.subr.mxu0 0.0
  %746 = vmatpush1.msra.mxu0 0.0
  %747 = vmatprep.subr.mxu0 0.0
  %748 = vmatpush1.msra.mxu0 0.0
  %749 = vmatprep.subr.mxu0 0.0
  %750 = vmatpush1.msra.mxu0 0.0
  %751 = vmatprep.subr.mxu0 0.0
  %752 = vmatpush1.msra.mxu0 0.0
  %753 = vmatprep.subr.mxu0 0.0
  %754 = vmatpush1.msra.mxu0 0.0
  %755 = vmatprep.subr.mxu0 0.0
  %756 = vmatpush1.msra.mxu0 0.0
  %757 = vmatprep.subr.mxu0 0.0
  %758 = vmatpush1.msra.mxu0 0.0
  %759 = vmatprep.subr.mxu0 0.0
  %760 = vmatpush1.msra.mxu0 0.0
  %761 = vmatprep.subr.mxu0 0.0
  %762 = vmatpush1.msra.mxu0 0.0
  %763 = vmatprep.subr.mxu0 0.0
  %764 = vmatpush1.msra.mxu0 0.0
  %765 = vmatprep.subr.mxu0 0.0
  %766 = vmatpush1.msra.mxu0 0.0
  %767 = vmatprep.subr.mxu0 0.0
  %768 = vmatpush1.msra.mxu0 0.0
  %769 = vmatprep.subr.mxu0 0.0
  %770 = vmatpush1.msra.mxu0 0.0
  %771 = vmatprep.subr.mxu0 0.0
  %772 = vmatpush1.msra.mxu0 0.0
  %773 = vmatprep.subr.mxu0 0.0
  %774 = vmatpush1.msra.mxu0 0.0
  %775 = vmatprep.subr.mxu0 0.0
  %776 = vmatpush1.msra.mxu0 0.0
  %777 = vmatprep.subr.mxu0 0.0
  %778 = vmatpush1.msra.mxu0 0.0
  %779 = vmatprep.subr.mxu0 0.0
  %780 = vmatpush1.msra.mxu0 0.0
  %781 = vmatprep.subr.mxu0 0.0
  %782 = vmatpush1.msra.mxu0 0.0
  %783 = vmatprep.mubr.f32.mxu0 0.0
  %784 = vmatmul.mubr.f32.gmra.mrb[0].mxu0 %v624
  %v785 = vpop.f32.mrb[0].mxu0
  %v786 = vadd.f32 %v621, %v785
  %v787 = vpop.f32.mrb[0].mxu0
  %788 = vmatprep.mubr.f32.mxu0 0.0
  %789 = vmatmul.mubr.f32.gmra.mrb[0].mxu0 %v627
  %v790 = vpop.f32.mrb[0].mxu0
  %v791 = vadd.f32 %v621, %v790
  %v792 = vpop.f32.mrb[0].mxu0
  %793 = vmatprep.mubr.f32.mxu0 0.0
  %794 = vmatmul.mubr.f32.gmra.mrb[0].mxu0 %v630
  %v795 = vpop.f32.mrb[0].mxu0
  %v796 = vadd.f32 %v621, %v795
  %v797 = vpop.f32.mrb[0].mxu0
  %798 = vmatprep.mubr.f32.mxu0 0.0
  %799 = vmatmul.mubr.f32.gmra.mrb[0].mxu0 %v633
  %v800 = vpop.f32.mrb[0].mxu0
  %v801 = vadd.f32 %v621, %v800
  %v802 = vpop.f32.mrb[0].mxu0
  %803 = vmatprep.mubr.f32.mxu0 0.0
  %804 = vmatmul.mubr.f32.gmra.mrb[0].mxu0 %v636
  %v805 = vpop.f32.mrb[0].mxu0
  %v806 = vadd.f32 %v621, %v805
  %v807 = vpop.f32.mrb[0].mxu0
  %808 = vmatprep.mubr.f32.mxu0 0.0
  %809 = vmatmul.mubr.f32.gmra.mrb[0].mxu0 %v639
  %v810 = vpop.f32.mrb[0].mxu0
  %v811 = vadd.f32 %v621, %v810
  %v812 = vpop.f32.mrb[0].mxu0
  %813 = vmatprep.mubr.f32.mxu0 0.0
  %814 = vmatmul.mubr.f32.gmra.mrb[0].mxu0 %v642
  %v815 = vpop.f32.mrb[0].mxu0
  %v816 = vadd.f32 %v621, %v815
  %v817 = vpop.f32.mrb[0].mxu0
  %818 = vmatprep.mubr.f32.mxu0 0.0
  %819 = vmatmul.mubr.f32.gmra.mrb[0].mxu0 %v645
  %v820 = vpop.f32.mrb[0].mxu0
  %v821 = vadd.f32 %v621, %v820
  %v822 = vpop.f32.mrb[0].mxu0
  %823 = vmatprep.mubr.f32.mxu0 0.0
  %824 = vmatmul.mubr.f32.gmra.mrb[0].mxu0 %v648
  %v825 = vpop.f32.mrb[0].mxu0
  %v826 = vadd.f32 %v621, %v825
  %v827 = vpop.f32.mrb[0].mxu0
  %828 = vmatprep.mubr.f32.mxu0 0.0
  %829 = vmatmul.mubr.f32.gmra.mrb[0].mxu0 %v651
  %v830 = vpop.f32.mrb[0].mxu0
  %v831 = vadd.f32 %v621, %v830
  %v832 = vpop.f32.mrb[0].mxu0
  %833 = vmatprep.mubr.f32.mxu0 0.0
  %834 = vmatmul.mubr.f32.gmra.mrb[0].mxu0 %v654
  %v835 = vpop.f32.mrb[0].mxu0
  %v836 = vadd.f32 %v621, %v835
  %v837 = vpop.f32.mrb[0].mxu0
  %838 = vmatprep.mubr.f32.mxu0 0.0
  %839 = vmatmul.mubr.f32.gmra.mrb[0].mxu0 %v657
  %v840 = vpop.f32.mrb[0].mxu0
  %v841 = vadd.f32 %v621, %v840
  %v842 = vpop.f32.mrb[0].mxu0
  %843 = vmatprep.mubr.f32.mxu0 0.0
  %844 = vmatmul.mubr.f32.gmra.mrb[0].mxu0 %v660
  %v845 = vpop.f32.mrb[0].mxu0
  %v846 = vadd.f32 %v621, %v845
  %v847 = vpop.f32.mrb[0].mxu0
  %848 = vmatprep.mubr.f32.mxu0 0.0
  %849 = vmatmul.mubr.f32.gmra.mrb[0].mxu0 %v663
  %v850 = vpop.f32.mrb[0].mxu0
  %v851 = vadd.f32 %v621, %v850
  %v852 = vpop.f32.mrb[0].mxu0
  %853 = vmatprep.mubr.f32.mxu0 0.0
  %854 = vmatmul.mubr.f32.gmra.mrb[0].mxu0 %v666
  %v855 = vpop.f32.mrb[0].mxu0
  %v856 = vadd.f32 %v621, %v855
  %v857 = vpop.f32.mrb[0].mxu0
  %858 = vmatprep.mubr.f32.mxu0 0.0
  %859 = vmatmul.mubr.f32.gmra.mrb[0].mxu0 %v669
  %v860 = vpop.f32.mrb[0].mxu0
  %v861 = vadd.f32 %v621, %v860
  %v862 = vpop.f32.mrb[0].mxu0
  %863 = vmatprep.mubr.f32.mxu0 0.0
  %864 = vmatmul.mubr.f32.gmra.mrb[0].mxu0 %v672
  %v865 = vpop.f32.mrb[0].mxu0
  %v866 = vadd.f32 %v621, %v865
  %v867 = vpop.f32.mrb[0].mxu0
  %868 = vmatprep.mubr.f32.mxu0 0.0
  %869 = vmatmul.mubr.f32.gmra.mrb[0].mxu0 %v675
  %v870 = vpop.f32.mrb[0].mxu0
  %v871 = vadd.f32 %v621, %v870
  %v872 = vpop.f32.mrb[0].mxu0
  %873 = vmatprep.mubr.f32.mxu0 0.0
  %874 = vmatmul.mubr.f32.gmra.mrb[0].mxu0 %v678
  %v875 = vpop.f32.mrb[0].mxu0
  %v876 = vadd.f32 %v621, %v875
  %v877 = vpop.f32.mrb[0].mxu0
  %878 = vmatprep.mubr.f32.mxu0 0.0
  %879 = vmatmul.mubr.f32.gmra.mrb[0].mxu0 %v681
  %v880 = vpop.f32.mrb[0].mxu0
  %v881 = vadd.f32 %v621, %v880
  %v882 = vpop.f32.mrb[0].mxu0
  %883 = vmatprep.mubr.f32.mxu0 0.0
  %884 = vmatmul.mubr.f32.gmra.mrb[0].mxu0 %v684
  %v885 = vpop.f32.mrb[0].mxu0
  %v886 = vadd.f32 %v621, %v885
  %v887 = vpop.f32.mrb[0].mxu0
  %888 = vmatprep.mubr.f32.mxu0 0.0
  %889 = vmatmul.mubr.f32.gmra.mrb[0].mxu0 %v687
  %v890 = vpop.f32.mrb[0].mxu0
  %v891 = vadd.f32 %v621, %v890
  %v892 = vpop.f32.mrb[0].mxu0
  %893 = vmatprep.mubr.f32.mxu0 0.0
  %894 = vmatmul.mubr.f32.gmra.mrb[0].mxu0 %v690
  %v895 = vpop.f32.mrb[0].mxu0
  %v896 = vadd.f32 %v621, %v895
  %v897 = vpop.f32.mrb[0].mxu0
  %898 = vmatprep.mubr.f32.mxu0 0.0
  %899 = vmatmul.mubr.f32.gmra.mrb[0].mxu0 %v693
  %v900 = vpop.f32.mrb[0].mxu0
  %v901 = vadd.f32 %v621, %v900
  %v902 = vpop.f32.mrb[0].mxu0
  %903 = vmatprep.mubr.f32.mxu0 0.0
  %904 = vmatmul.mubr.f32.gmra.mrb[0].mxu0 %v696
  %v905 = vpop.f32.mrb[0].mxu0
  %v906 = vadd.f32 %v621, %v905
  %v907 = vpop.f32.mrb[0].mxu0
  %908 = vmatprep.mubr.f32.mxu0 0.0
  %909 = vmatmul.mubr.f32.gmra.mrb[0].mxu0 %v699
  %v910 = vpop.f32.mrb[0].mxu0
  %v911 = vadd.f32 %v621, %v910
  %v912 = vpop.f32.mrb[0].mxu0
  %913 = vmatprep.mubr.f32.mxu0 0.0
  %914 = vmatmul.mubr.f32.gmra.mrb[0].mxu0 %v702
  %v915 = vpop.f32.mrb[0].mxu0
  %v916 = vadd.f32 %v621, %v915
  %v917 = vpop.f32.mrb[0].mxu0
  %918 = vmatprep.mubr.f32.mxu0 0.0
  %919 = vmatmul.mubr.f32.gmra.mrb[0].mxu0 %v705
  %v920 = vpop.f32.mrb[0].mxu0
  %v921 = vadd.f32 %v621, %v920
  %v922 = vpop.f32.mrb[0].mxu0
  %923 = vmatprep.mubr.f32.mxu0 0.0
  %924 = vmatmul.mubr.f32.gmra.mrb[0].mxu0 %v708
  %v925 = vpop.f32.mrb[0].mxu0
  %v926 = vadd.f32 %v621, %v925
  %v927 = vpop.f32.mrb[0].mxu0
  %928 = vmatprep.mubr.f32.mxu0 0.0
  %929 = vmatmul.mubr.f32.gmra.mrb[0].mxu0 %v711
  %v930 = vpop.f32.mrb[0].mxu0
  %v931 = vadd.f32 %v621, %v930
  %v932 = vpop.f32.mrb[0].mxu0
  %933 = vmatprep.mubr.f32.mxu0 0.0
  %934 = vmatmul.mubr.f32.gmra.mrb[0].mxu0 %v714
  %v935 = vpop.f32.mrb[0].mxu0
  %v936 = vadd.f32 %v621, %v935
  %v937 = vpop.f32.mrb[0].mxu0
  %938 = vmatprep.mubr.f32.mxu0 0.0
  %939 = vmatmul.mubr.f32.gmra.mrb[0].mxu0 %v717
  %v940 = vpop.f32.mrb[0].mxu0
  %v941 = vadd.f32 %v621, %v940
  %v942 = vpop.f32.mrb[0].mxu0
  %943 = vdwg.mxu0
  %944 = vst.msk [vmem:[%s7] sm:$0xff] %vm389, %v786
  %945 = vst.msk [vmem:[%s7 + $0x8] sm:$0xff] %vm389, %v791
  %946 = vst.msk [vmem:[%s7 + $0x10] sm:$0xff] %vm389, %v796
  %947 = vst.msk [vmem:[%s7 + $0x18] sm:$0xff] %vm389, %v801
  %948 = vst.msk [vmem:[%s7 + $0x20] sm:$0xff] %vm389, %v806
  %949 = vst.msk [vmem:[%s7 + $0x28] sm:$0xff] %vm389, %v811
  %950 = vst.msk [vmem:[%s7 + $0x30] sm:$0xff] %vm389, %v816
  %951 = vst.msk [vmem:[%s7 + $0x38] sm:$0xff] %vm389, %v821
  %952 = vst.msk [vmem:[%s7 + $0x40] sm:$0xff] %vm389, %v826
  %953 = vst.msk [vmem:[%s7 + $0x48] sm:$0xff] %vm389, %v831
  %954 = vst.msk [vmem:[%s7 + $0x50] sm:$0xff] %vm389, %v836
  %955 = vst.msk [vmem:[%s7 + $0x58] sm:$0xff] %vm389, %v841
  %956 = vst.msk [vmem:[%s7 + $0x60] sm:$0xff] %vm389, %v846
  %957 = vst.msk [vmem:[%s7 + $0x68] sm:$0xff] %vm389, %v851
  %958 = vst.msk [vmem:[%s7 + $0x70] sm:$0xff] %vm389, %v856
  %959 = vst.msk [vmem:[%s7 + $0x78] sm:$0xff] %vm389, %v861
  %960 = vst.msk [vmem:[%s7 + $0x80] sm:$0xff] %vm389, %v866
  %961 = vst.msk [vmem:[%s7 + $0x88] sm:$0xff] %vm389, %v871
  %962 = vst.msk [vmem:[%s7 + $0x90] sm:$0xff] %vm389, %v876
  %963 = vst.msk [vmem:[%s7 + $0x98] sm:$0xff] %vm389, %v881
  %964 = vst.msk [vmem:[%s7 + $0xa0] sm:$0xff] %vm389, %v886
  %965 = vst.msk [vmem:[%s7 + $0xa8] sm:$0xff] %vm389, %v891
  %966 = vst.msk [vmem:[%s7 + $0xb0] sm:$0xff] %vm389, %v896
  %967 = vst.msk [vmem:[%s7 + $0xb8] sm:$0xff] %vm389, %v901
  %968 = vst.msk [vmem:[%s7 + $0xc0] sm:$0xff] %vm389, %v906
  %969 = vst.msk [vmem:[%s7 + $0xc8] sm:$0xff] %vm389, %v911
  %970 = vst.msk [vmem:[%s7 + $0xd0] sm:$0xff] %vm389, %v916
  %971 = vst.msk [vmem:[%s7 + $0xd8] sm:$0xff] %vm389, %v921
  %972 = vst.msk [vmem:[%s7 + $0xe0] sm:$0xff] %vm389, %v926
  %973 = vst.msk [vmem:[%s7 + $0xe8] sm:$0xff] %vm389, %v931
  %974 = vst.msk [vmem:[%s7 + $0xf0] sm:$0xff] %vm389, %v936
  %975 = vst.msk [vmem:[%s7 + $0xf8] sm:$0xff] %vm389, %v941
  // Predicated region
  $region26: #{tpu_custom_call.1} parent=0 // pred_check
    _
  $region27: #{tpu_custom_call.1} parent=0 // pred_check_branch
    %977 = sbr.rel (0) target = $region29
  $region28: #{tpu_custom_call.1} parent=0 // pred_region
    _
  $region29: #{tpu_custom_call.1} parent=0 // pred_fallthru
    _
  // Predicated region
  $region30: #{tpu_custom_call.1} parent=0 // pred_check
    _
  $region31: #{tpu_custom_call.1} parent=0 // pred_check_branch
    %979 = sbr.rel (0) target = $region33
  $region32: #{tpu_custom_call.1} parent=0 // pred_region
    _
  $region33: #{tpu_custom_call.1} parent=0 // pred_fallthru
    _
  // Predicated region
  $region34: #{tpu_custom_call.1} parent=0 // pred_check
    _
  $region35: #{tpu_custom_call.1} parent=0 // pred_check_branch
    %981 = sbr.rel (0) target = $region37
  $region36: #{tpu_custom_call.1} parent=0 // pred_region
    _
  $region37: #{tpu_custom_call.1} parent=0 // pred_fallthru
    _
  // Predicated region
  $region38: #{tpu_custom_call.1} parent=0 // pred_check
    _
  $region39: #{tpu_custom_call.1} parent=0 // pred_check_branch
    %983 = sbr.rel (0) target = $region41
  $region40: #{tpu_custom_call.1} parent=0 // pred_region
    _
  $region41: #{tpu_custom_call.1} parent=0 // pred_fallthru
    _
  // Predicated region
  $region42: #{tpu_custom_call.1} parent=0 // pred_check
    _
  $region43: #{tpu_custom_call.1} parent=0 // pred_check_branch
    %985 = sbr.rel (0) target = $region45
  $region44: #{tpu_custom_call.1} parent=0 // pred_region
    _
  $region45: #{tpu_custom_call.1} parent=0 // pred_fallthru
    _
  // Predicated region
  $region46: #{tpu_custom_call.1} parent=0 // pred_check
    _
  $region47: #{tpu_custom_call.1} parent=0 // pred_check_branch
    %987 = sbr.rel (0) target = $region49
  $region48: #{tpu_custom_call.1} parent=0 // pred_region
    _
  $region49: #{tpu_custom_call.1} parent=0 // pred_fallthru
    _

</llo_original>
